<compile_context>
chip_gen: v6e
topology: v6e:2x2x1
jax: 0.10.0
libtpu: 0.0.40
codegen_flags: <defaults>
</compile_context>

<pallas_src>
from functools import partial

import jax
import jax.numpy as jnp
from jax.experimental import pallas as pl
from jax.experimental.pallas import tpu as pltpu

_LANES = 128          # vreg lane width
_TARGET_COLS = 1024   # lane-dense slab width (multiple of 128)
_TILE_ROWS = 512      # 512 x 1024 f32 = 2 MiB per block


def _identity_kernel(x_ref, o_ref):
    # Pure elementwise pass-through on the current VMEM tile.
    o_ref[...] = x_ref[...]


@jax.jit
def base_architecture_forward(x: jax.Array) -> jax.Array:
    """Identity forward for the abstract BaseArchitecture (no params)."""
    orig_shape = x.shape
    total = x.size

    # Lane-dense 2D slab: put >=128 (ideally 1024) elements on the lane axis.
    cols = _TARGET_COLS if total >= _TARGET_COLS else _LANES

    rows = pl.cdiv(total, cols)
    if rows > _TILE_ROWS:
        # Tile the row axis; round rows up to a tile multiple so the grid is
        # exact (no silently-dropped remainder rows).
        padded_rows = pl.cdiv(rows, _TILE_ROWS) * _TILE_ROWS
        tile_rows = _TILE_ROWS
    else:
        # Small input: single full-extent block (fits trivially in VMEM).
        padded_rows = rows
        tile_rows = rows

    padded_total = padded_rows * cols
    flat = x.reshape(-1)
    if padded_total != total:
        flat = jnp.pad(flat, (0, padded_total - total))
    x2d = flat.reshape(padded_rows, cols)

    grid_rows = padded_rows // tile_rows

    out2d = pl.pallas_call(
        _identity_kernel,
        out_shape=jax.ShapeDtypeStruct((padded_rows, cols), x2d.dtype),
        grid=(grid_rows,),
        in_specs=[pl.BlockSpec((tile_rows, cols), lambda i: (i, 0))],
        out_specs=pl.BlockSpec((tile_rows, cols), lambda i: (i, 0)),
        # Output aliases the input slab: no extra HBM buffer / writeback.
        input_output_aliases={0: 0},
        compiler_params=pltpu.CompilerParams(
            dimension_semantics=("parallel",),
        ),
    )(x2d)

    return out2d.reshape(-1)[:total].reshape(orig_shape)


if __name__ == "__main__":
    key = jax.random.PRNGKey(0)
    # NCHW input consistent with a conv-style architecture base class.
    x = jax.random.normal(key, (2, 4, 16, 16), dtype=jnp.float32)

    y = base_architecture_forward(x)
    jax.block_until_ready(y)

    assert y.shape == x.shape and y.dtype == x.dtype
    assert bool(jnp.allclose(y, x))
    print("KERNEL_OK")
</pallas_src>

<mosaic_0001>
module attributes {stable_mosaic.version = 11 : i64} {
  func.func @_identity_kernel(%arg0: i32, %arg1: memref<2x1024xf32, #tpu.memory_space<vmem>>, %arg2: memref<2x1024xf32, #tpu.memory_space<vmem>>) attributes {dimension_semantics = [#tpu.dimension_semantics<parallel>], iteration_bounds = array<i64: 1>, scalar_prefetch = 0 : i64, scratch_operands = 0 : i64, tpu.core_type = #tpu.core_type<tc>, window_params = [{transform_indices = @transform_0, window_bounds = array<i64: 2, 1024>}, {transform_indices = @transform_1, window_bounds = array<i64: 2, 1024>}]} {
    %c0 = arith.constant 0 : index
    %c0_0 = arith.constant 0 : index
    %0 = vector.load %arg1[%c0, %c0_0] : memref<2x1024xf32, #tpu.memory_space<vmem>>, vector<2x1024xf32>
    %c0_1 = arith.constant 0 : index
    %c0_2 = arith.constant 0 : index
    %1 = vector.load %arg2[%c0_1, %c0_2] : memref<2x1024xf32, #tpu.memory_space<vmem>>, vector<2x1024xf32>
    tpu.vector_store %arg2[%c0_1, %c0_2], %0 {strides = array<i32>} : memref<2x1024xf32, #tpu.memory_space<vmem>>, vector<2x1024xf32>,
    return
  }
  func.func @transform_0(%arg0: i32) -> (i32, i32) {
    %c0_i32 = arith.constant 0 : i32
    %c0_i32_0 = arith.constant 0 : i32
    return %arg0, %c0_i32 : i32, i32
  }
  func.func @transform_1(%arg0: i32) -> (i32, i32) {
    %c0_i32 = arith.constant 0 : i32
    %c0_i32_0 = arith.constant 0 : i32
    return %arg0, %c0_i32 : i32, i32
  }
}

</mosaic_0001>

<llo_original>
// kernel: base_architecture_forward.1
$region0: #{base_architecture_forward.1}
  #allocation0 [shape = 'u32[]', space=smem, size = 0x4, offset = 0x4, fixed_abs, tag = 'smem constant byte address 0x4 - core index']
  #allocation1 [shape = 'u32[144,128]{1,0:T(1,128)}', space=vmem, size = 0x12000, scoped, tag = 'internal scratch']
  %s0 = inlined_call_operand.vmem [shape: f32[2,1024], index: 0, kind: input, shape index: {}, may-alias: {0,1}]
  %s1 = inlined_call_operand.vmem [shape: f32[2,1024], index: 1, kind: output, shape index: {}, may-alias: {0,1}]
  %s2 = sld [smem:[#allocation0]]
  $region14: #{base_architecture_forward.1} parent=0
    _
  %s4 = ssub.s32 1, %s2
  %s5 = scalar_select 0, %s4, %s2
  // Predicated region
  $region2: #{base_architecture_forward.1} parent=0 // pred_check
    _
  $region3: #{base_architecture_forward.1} parent=0 // pred_check_branch
    %7 = sbr.rel (0) target = $region5
  $region4: #{base_architecture_forward.1} parent=0 // pred_region
    _
  $region5: #{base_architecture_forward.1} parent=0 // pred_fallthru
    _
  %v8 = vld [vmem:[%s0] sm:$0xff]
  %v9 = vld [vmem:[%s0 + $0x8] sm:$0xff]
  %10 = vst [vmem:[%s1] sm:$0xff] %v8
  %11 = vst [vmem:[%s1 + $0x8] sm:$0xff] %v9
  // Predicated region
  $region6: #{base_architecture_forward.1} parent=0 // pred_check
    _
  $region7: #{base_architecture_forward.1} parent=0 // pred_check_branch
    %13 = sbr.rel (0) target = $region9
  $region8: #{base_architecture_forward.1} parent=0 // pred_region
    _
  $region9: #{base_architecture_forward.1} parent=0 // pred_fallthru
    _
  // Predicated region
  $region10: #{base_architecture_forward.1} parent=0 // pred_check
    _
  $region11: #{base_architecture_forward.1} parent=0 // pred_check_branch
    %15 = sbr.rel (0) target = $region13
  $region12: #{base_architecture_forward.1} parent=0 // pred_region
    _
  $region13: #{base_architecture_forward.1} parent=0 // pred_fallthru
    _

</llo_original>
